<compile_context>
chip_gen: v5e
topology: v5e:2x2
jax: 0.10.0
libtpu: 0.0.40
codegen_flags: <defaults>
</compile_context>

<pallas_src>
import functools
import math

import jax
import jax.numpy as jnp
from jax import lax
from jax.experimental import pallas as pl
from jax.experimental.pallas import tpu as pltpu


LANE = 128
VMEM_BUDGET = 48 * 1024 * 1024        # keep under v7x's 64 MiB physical VMEM
RESIDENT_XW_LIMIT = 24 * 1024 * 1024  # keep xw resident only if it fits comfortably


# ---------------------------------------------------------------------------
# helpers
# ---------------------------------------------------------------------------
def _pad_to(x, m):
    return ((x + m - 1) // m) * m


def _pick_tile(n_pad0, target):
    """Largest power-of-two multiple of 128 that is <= min(target, n_pad0) and
    keeps the node-padding waste of rounding n_pad0 up to a multiple of it
    below ~6% (adj cost is quadratic in padded nodes)."""
    cap = max(LANE, min(target, n_pad0))
    t = LANE
    while t * 2 <= cap:
        t *= 2
    while t > LANE and (_pad_to(n_pad0, t) - n_pad0) * 16 > n_pad0:
        t //= 2
    return t


def _plan(n_nodes):
    """Pick tiles first, then pad the node count up to a multiple of them."""
    n_pad0 = _pad_to(max(n_nodes, 1), LANE)
    # Keep >= 2 row tiles whenever possible so the 'parallel' axis can shard
    # across both TensorCores on v7x.
    tm_cap = n_pad0 // 2 if n_pad0 >= 2 * LANE else n_pad0
    tm = _pick_tile(n_pad0, min(512, tm_cap))
    tk = _pick_tile(n_pad0, 4096)
    n_pad = _pad_to(n_pad0, max(tm, tk))
    return tm, tk, n_pad


def _vmem_limit(working_set_bytes):
    return int(min(max(working_set_bytes * 1.25 + (4 << 20), 32 << 20),
                   VMEM_BUDGET))


# ---------------------------------------------------------------------------
# Kernel 1: projection  xw = h @ W   (bf16 in, f32 accumulate, bf16 out)
# ---------------------------------------------------------------------------
def _project_kernel(x_ref, w_ref, o_ref):
    o_ref[...] = jnp.dot(
        x_ref[...], w_ref[...], preferred_element_type=jnp.float32
    ).astype(o_ref.dtype)


def project(h, w_pad, *, tm):
    n_pad, cin_p = h.shape
    cout_p = w_pad.shape[1]
    w_bytes = cin_p * cout_p * 2

    def working_set(tm_):
        return (2 * tm_ * cin_p * 2      # double-buffered x tiles (bf16)
                + w_bytes                # W resident (bf16, loaded once)
                + 2 * tm_ * cout_p * 2)  # double-buffered output (bf16)

    while tm > LANE and working_set(tm) > VMEM_BUDGET:
        tm //= 2
    # TODO(synk): if W alone ever exceeds the VMEM budget (very large Cin*Cout),
    #             re-introduce a k-tiled accumulation grid for the projection.

    grid = (n_pad // tm,)
    cost = pl.CostEstimate(
        flops=2 * n_pad * cin_p * cout_p,
        transcendentals=0,
        bytes_accessed=n_pad * cin_p * 2 + w_bytes + n_pad * cout_p * 2,
    )
    return pl.pallas_call(
        _project_kernel,
        out_shape=jax.ShapeDtypeStruct((n_pad, cout_p), jnp.bfloat16),
        grid=grid,
        in_specs=[
            pl.BlockSpec((tm, cin_p), lambda i: (i, 0)),
            pl.BlockSpec((cin_p, cout_p), lambda i: (0, 0)),  # constant -> DMA once
        ],
        out_specs=pl.BlockSpec((tm, cout_p), lambda i: (i, 0)),
        compiler_params=pltpu.CompilerParams(
            dimension_semantics=("parallel",),
            vmem_limit_bytes=_vmem_limit(working_set(tm)),
        ),
        cost_estimate=cost,
    )(h, w_pad)


# ---------------------------------------------------------------------------
# Kernel 2: aggregation  out = adj @ xw + b  (+ LeakyReLU / row-L2-normalize)
# ---------------------------------------------------------------------------
def _aggregate_kernel(adj_ref, xw_ref, b_ref, o_ref, acc_ref, *,
                      tk, resident_xw, relu, normalize):
    k = pl.program_id(1)

    @pl.when(k == 0)
    def _():
        acc_ref[...] = jnp.zeros_like(acc_ref)

    if resident_xw:
        # xw lives fully in VMEM (loaded once for the whole grid); slice the
        # current contraction chunk out of it.
        koff = pl.multiple_of(k * tk, tk)
        xw_blk = xw_ref[pl.ds(koff, tk), :]
    else:
        xw_blk = xw_ref[...]

    acc_ref[...] += jnp.dot(
        adj_ref[...], xw_blk, preferred_element_type=jnp.float32
    )

    @pl.when(k == pl.num_programs(1) - 1)
    def _():
        out = acc_ref[...] + b_ref[...]
        if relu:
            # LeakyReLU with negative_slope=0.2
            out = jnp.where(out >= 0, out, 0.2 * out)
        if normalize:
            # F.normalize: x / max(||x||_2, 1e-12) == x * rsqrt(max(sumsq, 1e-24))
            # (padded channel lanes are exactly zero -> no effect on sumsq)
            sumsq = jnp.sum(out * out, axis=1, keepdims=True)
            out = out * lax.rsqrt(jnp.maximum(sumsq, 1e-24))
        o_ref[...] = out.astype(o_ref.dtype)


def aggregate(adj_p, xw, b_pad, *, tm, tk, relu, normalize):
    n_pad = adj_p.shape[0]
    cout_p = xw.shape[1]
    out_dtype = jnp.float32 if normalize else jnp.bfloat16
    out_isz = jnp.dtype(out_dtype).itemsize

    xw_bytes = n_pad * cout_p * 2
    resident = xw_bytes <= RESIDENT_XW_LIMIT

    def working_set(tk_):
        s = 2 * tm * tk_ * 2                                   # adj tiles (bf16, x2)
        s += xw_bytes if resident else 2 * tk_ * cout_p * 2    # xw resident / streamed
        s += tm * cout_p * 4                                   # f32 accumulator
        s += 2 * tm * cout_p * out_isz                         # output (x2)
        s += 2 * 8 * cout_p * 4                                # bias (overestimate)
        return s

    while tk > LANE and working_set(tk) > VMEM_BUDGET:
        tk //= 2

    grid = (n_pad // tm, n_pad // tk)

    if resident:
        xw_spec = pl.BlockSpec((n_pad, cout_p), lambda i, k: (0, 0))  # DMA'd once
    else:
        xw_spec = pl.BlockSpec((tk, cout_p), lambda i, k: (k, 0))

    kernel = functools.partial(
        _aggregate_kernel, tk=tk, resident_xw=resident,
        relu=relu, normalize=normalize,
    )

    xw_traffic = xw_bytes if resident else xw_bytes * grid[0]
    cost = pl.CostEstimate(
        flops=2 * n_pad * n_pad * cout_p,
        transcendentals=n_pad if normalize else 0,
        bytes_accessed=(n_pad * n_pad * 2          # adj (bf16)
                        + xw_traffic               # xw
                        + cout_p * 4               # bias
                        + n_pad * cout_p * out_isz),
    )
    return pl.pallas_call(
        kernel,
        out_shape=jax.ShapeDtypeStruct((n_pad, cout_p), out_dtype),
        grid=grid,
        in_specs=[
            pl.BlockSpec((tm, tk), lambda i, k: (i, k)),
            xw_spec,
            pl.BlockSpec((1, cout_p), lambda i, k: (0, 0)),
        ],
        out_specs=pl.BlockSpec((tm, cout_p), lambda i, k: (i, 0)),
        scratch_shapes=[pltpu.VMEM((tm, cout_p), jnp.float32)],
        compiler_params=pltpu.CompilerParams(
            dimension_semantics=("parallel", "arbitrary"),
            vmem_limit_bytes=_vmem_limit(working_set(tk)),
        ),
        cost_estimate=cost,
    )(adj_p, xw, b_pad)


# ---------------------------------------------------------------------------
# Parameter construction (mirrors GCN.__init__ parsing of `hidden_layers`)
# ---------------------------------------------------------------------------
def xavier_uniform(key, fan_in, fan_out):
    bound = math.sqrt(6.0 / (fan_in + fan_out))
    return jax.random.uniform(
        key, (fan_in, fan_out), dtype=jnp.float32, minval=-bound, maxval=bound
    )


def build_gcn_params(key, in_channels, out_channels, hidden_layers):
    hl = hidden_layers.split(",")
    if hl[-1] == "d":
        hl = hl[:-1]  # dropout_last: identity at inference
    layer_defs = []  # (cin, cout, relu)
    last_c = in_channels
    for c in hl:
        if c[0] == "d":
            c = c[1:]  # dropout: identity at inference
        c = int(c)
        layer_defs.append((last_c, c, True))
        last_c = c
    layer_defs.append((last_c, out_channels, False))

    params = []
    for (cin, cout, relu) in layer_defs:
        key, wkey = jax.random.split(key)
        w = xavier_uniform(wkey, cin, cout)
        cin_p = _pad_to(cin, LANE)
        cout_p = _pad_to(cout, LANE)
        # Lane-pad channel dims to multiples of 128 (zero padding); weights are
        # pre-cast to bf16 so the projection is a pure bf16 MXU matmul.
        w_pad = (jnp.zeros((cin_p, cout_p), jnp.bfloat16)
                 .at[:cin, :cout].set(w.astype(jnp.bfloat16)))
        b_pad = jnp.zeros((1, cout_p), jnp.float32)  # PyTorch init: zeros
        params.append(
            {"w": w_pad, "b": b_pad, "relu": relu, "cin": cin, "cout": cout}
        )
    return params


def prepare_adj(adj, n_pad):
    """Hoisted out of the forward: pad adj once (zeros) and cast to bf16.
    Padded COLUMNS must stay exactly zero so padded (garbage) activation rows
    never contaminate real rows via adj @ xw."""
    n = adj.shape[0]
    return (jnp.zeros((n_pad, n_pad), jnp.bfloat16)
            .at[:n, :n].set(adj.astype(jnp.bfloat16)))


# ---------------------------------------------------------------------------
# Forward pass
# ---------------------------------------------------------------------------
def gcn_forward(x, adj_p, params, *, n_nodes, tm, tk):
    n_pad = adj_p.shape[0]
    cin = x.shape[1]
    cin_p0 = params[0]["w"].shape[0]

    # Pad nodes + input channels once; activations travel in bf16 between
    # layers (all matmuls accumulate in f32 inside the kernels).
    h = (jnp.zeros((n_pad, cin_p0), jnp.bfloat16)
         .at[:n_nodes, :cin].set(x.astype(jnp.bfloat16)))

    n_layers = len(params)
    for li, p in enumerate(params):
        xw = project(h, p["w"], tm=tm)          # (n_pad, cout_p) bf16, once/layer
        h = aggregate(
            adj_p, xw, p["b"],
            tm=tm, tk=tk,
            relu=p["relu"],
            normalize=(li == n_layers - 1),     # final F.normalize fused in
        )

    # Padded rows / lanes are sliced off here (they never influenced real rows).
    return h[:n_nodes, :params[-1]["cout"]]


# Pure-JAX f32 reference (PyTorch semantics) using the same bf16-rounded
# weights / adjacency the kernels consume, for validation.
def gcn_reference(x, adj, params):
    h = x
    for p in params:
        cin, cout = p["cin"], p["cout"]
        w = p["w"][:cin, :cout].astype(jnp.float32)
        b = p["b"][0, :cout]
        h = adj @ (h @ w) + b
        if p["relu"]:
            h = jnp.where(h >= 0, h, 0.2 * h)
    norm = jnp.sqrt(jnp.sum(h * h, axis=1, keepdims=True))
    return h / jnp.maximum(norm, 1e-12)


# ---------------------------------------------------------------------------
# Demo / smoke test
# ---------------------------------------------------------------------------
if __name__ == "__main__":
    key = jax.random.PRNGKey(0)
    k_x, k_adj, k_params = jax.random.split(key, 3)

    N = 8                # number of graph nodes
    in_channels = 16
    out_channels = 8
    hidden_layers = "d32,16,d"   # same grammar as the PyTorch module

    x = jax.random.normal(k_x, (N, in_channels), dtype=jnp.float32)
    # symmetric row-normalized-ish adjacency (dense)
    a = jax.random.uniform(k_adj, (N, N), dtype=jnp.float32)
    adj = (a + a.T) * 0.5 + jnp.eye(N, dtype=jnp.float32)
    adj = adj / jnp.sum(adj, axis=1, keepdims=True)

    params = build_gcn_params(k_params, in_channels, out_channels, hidden_layers)

    tm, tk, n_pad = _plan(N)
    adj_p = prepare_adj(adj, n_pad)   # hoisted: pad + bf16 cast done once

    out = gcn_forward(x, adj_p, params, n_nodes=N, tm=tm, tk=tk)
    jax.block_until_ready(out)

    adj_q = adj_p[:N, :N].astype(jnp.float32)   # same quantized adj the kernel saw
    ref = gcn_reference(x, adj_q, params)

    assert out.shape == (N, out_channels)
    assert bool(jnp.all(jnp.isfinite(out)))
    # bf16 operands / bf16 intermediate h with f32 accumulation: generous tol.
    assert bool(jnp.allclose(out, ref, rtol=5e-2, atol=5e-2)), "mismatch vs reference"
    print("KERNEL_OK")
</pallas_src>

<mosaic_0001>
module attributes {stable_mosaic.version = 11 : i64} {
  func.func @_project_kernel(%arg0: i32, %arg1: memref<128x128xbf16, #tpu.memory_space<vmem>>, %arg2: memref<128x128xbf16, #tpu.memory_space<vmem>>, %arg3: memref<128x128xbf16, #tpu.memory_space<vmem>>) attributes {dimension_semantics = [#tpu.dimension_semantics<parallel>], iteration_bounds = array<i64: 1>, scalar_prefetch = 0 : i64, scratch_operands = 0 : i64, tpu.core_type = #tpu.core_type<tc>, window_params = [{transform_indices = @transform_0, window_bounds = array<i64: 128, 128>}, {pipeline_mode = #tpu.pipeline_mode<synchronous>, transform_indices = @transform_1, window_bounds = array<i64: 128, 128>}, {transform_indices = @transform_2, window_bounds = array<i64: 128, 128>}]} {
    %c0 = arith.constant 0 : index
    %c0_0 = arith.constant 0 : index
    %0 = vector.load %arg1[%c0, %c0_0] : memref<128x128xbf16, #tpu.memory_space<vmem>>, vector<128x128xbf16>
    %c0_1 = arith.constant 0 : index
    %c0_2 = arith.constant 0 : index
    %1 = vector.load %arg2[%c0_1, %c0_2] : memref<128x128xbf16, #tpu.memory_space<vmem>>, vector<128x128xbf16>
    %cst = arith.constant dense<0.000000e+00> : vector<128x128xf32>
    %2 = tpu.matmul %0, %1, %cst {dimension_numbers = #tpu.dot_dimension_numbers<[1], [0], [0], [1], [0, 0, 1, 1], [], []>} : vector<128x128xbf16>, vector<128x128xbf16>, vector<128x128xf32> -> vector<128x128xf32>
    %3 = arith.truncf %2 : vector<128x128xf32> to vector<128x128xbf16>
    %c0_3 = arith.constant 0 : index
    %c0_4 = arith.constant 0 : index
    %4 = vector.load %arg3[%c0_3, %c0_4] : memref<128x128xbf16, #tpu.memory_space<vmem>>, vector<128x128xbf16>
    tpu.vector_store %arg3[%c0_3, %c0_4], %3 {strides = array<i32>} : memref<128x128xbf16, #tpu.memory_space<vmem>>, vector<128x128xbf16>,
    return
  }
  func.func @transform_0(%arg0: i32) -> (i32, i32) {
    %c0_i32 = arith.constant 0 : i32
    %c0_i32_0 = arith.constant 0 : i32
    return %arg0, %c0_i32 : i32, i32
  }
  func.func @transform_1(%arg0: i32) -> (i32, i32) {
    %c0_i32 = arith.constant 0 : i32
    %c0_i32_0 = arith.constant 0 : i32
    %c0_i32_1 = arith.constant 0 : i32
    return %c0_i32, %c0_i32_0 : i32, i32
  }
  func.func @transform_2(%arg0: i32) -> (i32, i32) {
    %c0_i32 = arith.constant 0 : i32
    %c0_i32_0 = arith.constant 0 : i32
    return %arg0, %c0_i32 : i32, i32
  }
}

</mosaic_0001>

<llo_original>
// kernel: tpu_custom_call.1
$region0: #{tpu_custom_call.1}
  #allocation0 [shape = 'u32[]', space=smem, size = 0x4, offset = 0x4, fixed_abs, tag = 'smem constant byte address 0x4 - core index']
  #allocation1 [shape = 'u32[72,128]{1,0:T(1,128)}', space=vmem, size = 0x9000, scoped, tag = 'internal scratch']
  %s0 = inlined_call_operand.hbm [shape: bf16[128,128], index: 0, kind: input, shape index: {}]
  %s1 = inlined_call_operand.hbm [shape: bf16[128,128], index: 1, kind: input, shape index: {}]
  %s2 = inlined_call_operand.hbm [shape: bf16[128,128], index: 2, kind: output, shape index: {}]
  %s3 = sld [smem:[#allocation0]]
  $region26: #{tpu_custom_call.1} parent=0
    _
  %s5 = ssub.s32 1, %s3
  %s6 = scalar_select 0, %s5, %s3
  $region1: #{tpu_custom_call.1} parent=0
    #allocation2 [shape = 'u8[32768]{0}', space=vmem, size = 0x8000, scoped, tag = 'input window, operand 0, single buffered']
    #allocation3 [shape = 's32[1]{0}', space=sflag, size = 0x4, scoped, tag = 'scoped memory for tpu_custom_call.1']
    #allocation4 [shape = 's32[1]{0}', space=sflag, size = 0x4, scoped, tag = 'scoped memory for tpu_custom_call.1']
    #allocation5 [shape = 'u8[32768]{0}', space=vmem, size = 0x8000, scoped, tag = 'input window, operand 1, single buffered']
    #allocation6 [shape = 's32[1]{0}', space=sflag, size = 0x4, scoped, tag = 'scoped memory for tpu_custom_call.1']
    #allocation7 [shape = 'u8[32768]{0}', space=vmem, size = 0x8000, scoped, tag = 'output window, operand 0, single buffered']
    %7 = vsyncpa [#allocation3], 0
    %8 = vsyncpa [#allocation6], 0
    %9 = vsyncpa [#allocation4], 0
    // Predicated region
    $region2: #{tpu_custom_call.1} parent=1 // pred_check
      _
    $region3: #{tpu_custom_call.1} parent=1 // pred_check_branch
      %11 = sbr.rel (0) target = $region5
    $region4: #{tpu_custom_call.1} parent=1 // pred_region
      %13 = vsyncadd [#allocation3], 0
      %s14 = sshll.u32 %s0, 4
      %s15 = int_to_ptr.hbm [resolvable:$true] %s14
      %s16 = sshll.u32 [#allocation2], 4
      %s17 = int_to_ptr.vmem [resolvable:$true] %s16
      %22 = dma.hbm_to_vmem [thread:$0]  %s15, 1024, %s17, [#allocation3], 64, 64, 4
    $region5: #{tpu_custom_call.1} parent=1 // pred_fallthru
      _
    // Predicated region
    $region6: #{tpu_custom_call.1} parent=1 // pred_check
      _
    $region7: #{tpu_custom_call.1} parent=1 // pred_check_branch
      %24 = sbr.rel (0) target = $region9
    $region8: #{tpu_custom_call.1} parent=1 // pred_region
      %26 = vsyncadd [#allocation6], 0
      %s27 = sshll.u32 %s1, 4
      %s28 = int_to_ptr.hbm [resolvable:$true] %s27
      %s29 = sshll.u32 [#allocation5], 4
      %s30 = int_to_ptr.vmem [resolvable:$true] %s29
      %35 = dma.hbm_to_vmem [thread:$0]  %s28, 1024, %s30, [#allocation6], 64, 64, 4
    $region9: #{tpu_custom_call.1} parent=1 // pred_fallthru
      _
    // Predicated region
    $region10: #{tpu_custom_call.1} parent=1 // pred_check
      _
    $region11: #{tpu_custom_call.1} parent=1 // pred_check_branch
      %37 = sbr.rel (0) target = $region13
    $region12: #{tpu_custom_call.1} parent=1 // pred_region
      %39 = dma.done [#allocation3], 1024
    $region13: #{tpu_custom_call.1} parent=1 // pred_fallthru
      _
    // Predicated region
    $region14: #{tpu_custom_call.1} parent=1 // pred_check
      _
    $region15: #{tpu_custom_call.1} parent=1 // pred_check_branch
      %41 = sbr.rel (0) target = $region17
    $region16: #{tpu_custom_call.1} parent=1 // pred_region
      %43 = dma.done [#allocation6], 1024
    $region17: #{tpu_custom_call.1} parent=1 // pred_fallthru
      _
    %v44 = vld [vmem:[#allocation2] sm:$0xf]
    %v45 = vld [vmem:[#allocation2 + $0x4] sm:$0xf]
    %v46 = vld [vmem:[#allocation2 + $0x8] sm:$0xf]
    %v47 = vld [vmem:[#allocation2 + $0xc] sm:$0xf]
    %v48 = vld [vmem:[#allocation2 + $0x10] sm:$0xf]
    %v49 = vld [vmem:[#allocation2 + $0x14] sm:$0xf]
    %v50 = vld [vmem:[#allocation2 + $0x18] sm:$0xf]
    %v51 = vld [vmem:[#allocation2 + $0x1c] sm:$0xf]
    %v52 = vld [vmem:[#allocation2 + $0x20] sm:$0xf]
    %v53 = vld [vmem:[#allocation2 + $0x24] sm:$0xf]
    %v54 = vld [vmem:[#allocation2 + $0x28] sm:$0xf]
    %v55 = vld [vmem:[#allocation2 + $0x2c] sm:$0xf]
    %v56 = vld [vmem:[#allocation2 + $0x30] sm:$0xf]
    %v57 = vld [vmem:[#allocation2 + $0x34] sm:$0xf]
    %v58 = vld [vmem:[#allocation2 + $0x38] sm:$0xf]
    %v59 = vld [vmem:[#allocation2 + $0x3c] sm:$0xf]
    %v60 = vld [vmem:[#allocation5] sm:$0xf]
    %v61 = vld [vmem:[#allocation5 + $0x4] sm:$0xf]
    %v62 = vld [vmem:[#allocation5 + $0x8] sm:$0xf]
    %v63 = vld [vmem:[#allocation5 + $0xc] sm:$0xf]
    %v64 = vld [vmem:[#allocation5 + $0x10] sm:$0xf]
    %v65 = vld [vmem:[#allocation5 + $0x14] sm:$0xf]
    %v66 = vld [vmem:[#allocation5 + $0x18] sm:$0xf]
    %v67 = vld [vmem:[#allocation5 + $0x1c] sm:$0xf]
    %v68 = vld [vmem:[#allocation5 + $0x20] sm:$0xf]
    %v69 = vld [vmem:[#allocation5 + $0x24] sm:$0xf]
    %v70 = vld [vmem:[#allocation5 + $0x28] sm:$0xf]
    %v71 = vld [vmem:[#allocation5 + $0x2c] sm:$0xf]
    %v72 = vld [vmem:[#allocation5 + $0x30] sm:$0xf]
    %v73 = vld [vmem:[#allocation5 + $0x34] sm:$0xf]
    %v74 = vld [vmem:[#allocation5 + $0x38] sm:$0xf]
    %v75 = vld [vmem:[#allocation5 + $0x3c] sm:$0xf]
    %v92 = vunpack.c.l.b16 %v44
    %v93 = vunpack.c.l.b16 %v45
    %v94 = vunpack.c.l.b16 %v46
    %v95 = vunpack.c.l.b16 %v47
    %v96 = vunpack.c.l.b16 %v48
    %v97 = vunpack.c.l.b16 %v49
    %v98 = vunpack.c.l.b16 %v50
    %v99 = vunpack.c.l.b16 %v51
    %v100 = vunpack.c.l.b16 %v52
    %v101 = vunpack.c.l.b16 %v53
    %v102 = vunpack.c.l.b16 %v54
    %v103 = vunpack.c.l.b16 %v55
    %v104 = vunpack.c.l.b16 %v56
    %v105 = vunpack.c.l.b16 %v57
    %v106 = vunpack.c.l.b16 %v58
    %v107 = vunpack.c.l.b16 %v59
    %v108 = vpack.c.b16 %v93, %v92
    %v109 = vpack.c.b16 %v95, %v94
    %v110 = vpack.c.b16 %v97, %v96
    %v111 = vpack.c.b16 %v99, %v98
    %v112 = vpack.c.b16 %v101, %v100
    %v113 = vpack.c.b16 %v103, %v102
    %v114 = vpack.c.b16 %v105, %v104
    %v115 = vpack.c.b16 %v107, %v106
    %v140 = vunpack.c.l.b16 %v60
    %v141 = vunpack.c.l.b16 %v61
    %v142 = vunpack.c.l.b16 %v62
    %v143 = vunpack.c.l.b16 %v63
    %v144 = vunpack.c.l.b16 %v64
    %v145 = vunpack.c.l.b16 %v65
    %v146 = vunpack.c.l.b16 %v66
    %v147 = vunpack.c.l.b16 %v67
    %v148 = vunpack.c.l.b16 %v68
    %v149 = vunpack.c.l.b16 %v69
    %v150 = vunpack.c.l.b16 %v70
    %v151 = vunpack.c.l.b16 %v71
    %v152 = vunpack.c.l.b16 %v72
    %v153 = vunpack.c.l.b16 %v73
    %v154 = vunpack.c.l.b16 %v74
    %v155 = vunpack.c.l.b16 %v75
    %v156 = vpack.c.b16 %v141, %v140
    %v157 = vpack.c.b16 %v143, %v142
    %v158 = vpack.c.b16 %v145, %v144
    %v159 = vpack.c.b16 %v147, %v146
    %v160 = vpack.c.b16 %v149, %v148
    %v161 = vpack.c.b16 %v151, %v150
    %v162 = vpack.c.b16 %v153, %v152
    %v163 = vpack.c.b16 %v155, %v154
    %172 = vmatpush.bf16.msra.mxu0 %v163
    %173 = vmatpush.bf16.msra.mxu0 %v162
    %174 = vmatpush.bf16.msra.mxu0 %v161
    %175 = vmatpush.bf16.msra.mxu0 %v160
    %176 = vmatpush.bf16.msra.mxu0 %v159
    %177 = vmatpush.bf16.msra.mxu0 %v158
    %178 = vmatpush.bf16.msra.mxu0 %v157
    %179 = vmatpush.bf16.msra.mxu0 %v156
    %180 = vmatmul.bf16.gmra.mxu0 %v108
    %v181 = vpop.f32.mrf.mxu0
    %v182 = vadd.f32 0.0, %v181
    %v183 = vpop.f32.mrf.mxu0
    %v184 = vadd.f32 0.0, %v183
    %185 = vmatmul.bf16.gmra.mxu0 %v109
    %v186 = vpop.f32.mrf.mxu0
    %v187 = vadd.f32 0.0, %v186
    %v188 = vpop.f32.mrf.mxu0
    %v189 = vadd.f32 0.0, %v188
    %190 = vmatmul.bf16.gmra.mxu0 %v110
    %v191 = vpop.f32.mrf.mxu0
    %v192 = vadd.f32 0.0, %v191
    %v193 = vpop.f32.mrf.mxu0
    %v194 = vadd.f32 0.0, %v193
    %195 = vmatmul.bf16.gmra.mxu0 %v111
    %v196 = vpop.f32.mrf.mxu0
    %v197 = vadd.f32 0.0, %v196
    %v198 = vpop.f32.mrf.mxu0
    %v199 = vadd.f32 0.0, %v198
    %200 = vmatmul.bf16.gmra.mxu0 %v112
    %v201 = vpop.f32.mrf.mxu0
    %v202 = vadd.f32 0.0, %v201
    %v203 = vpop.f32.mrf.mxu0
    %v204 = vadd.f32 0.0, %v203
    %205 = vmatmul.bf16.gmra.mxu0 %v113
    %v206 = vpop.f32.mrf.mxu0
    %v207 = vadd.f32 0.0, %v206
    %v208 = vpop.f32.mrf.mxu0
    %v209 = vadd.f32 0.0, %v208
    %210 = vmatmul.bf16.gmra.mxu0 %v114
    %v211 = vpop.f32.mrf.mxu0
    %v212 = vadd.f32 0.0, %v211
    %v213 = vpop.f32.mrf.mxu0
    %v214 = vadd.f32 0.0, %v213
    %215 = vmatmul.bf16.gmra.mxu0 %v115
    %v216 = vpop.f32.mrf.mxu0
    %v217 = vadd.f32 0.0, %v216
    %v218 = vpop.f32.mrf.mxu0
    %v219 = vadd.f32 0.0, %v218
    %220 = vdwg.mxu0
    %v221 = vpack.c.bf16 %v182, %v182
    %v222 = vpack.c.bf16 %v184, %v184
    %v223 = vpack.c.bf16 %v187, %v187
    %v224 = vpack.c.bf16 %v189, %v189
    %v225 = vpack.c.bf16 %v192, %v192
    %v226 = vpack.c.bf16 %v194, %v194
    %v227 = vpack.c.bf16 %v197, %v197
    %v228 = vpack.c.bf16 %v199, %v199
    %v229 = vpack.c.bf16 %v202, %v202
    %v230 = vpack.c.bf16 %v204, %v204
    %v231 = vpack.c.bf16 %v207, %v207
    %v232 = vpack.c.bf16 %v209, %v209
    %v233 = vpack.c.bf16 %v212, %v212
    %v234 = vpack.c.bf16 %v214, %v214
    %v235 = vpack.c.bf16 %v217, %v217
    %v236 = vpack.c.bf16 %v219, %v219
    %237 = vst [vmem:[#allocation7] sm:$0xf] %v221
    %238 = vst [vmem:[#allocation7 + $0x4] sm:$0xf] %v222
    %239 = vst [vmem:[#allocation7 + $0x8] sm:$0xf] %v223
    %240 = vst [vmem:[#allocation7 + $0xc] sm:$0xf] %v224
    %241 = vst [vmem:[#allocation7 + $0x10] sm:$0xf] %v225
    %242 = vst [vmem:[#allocation7 + $0x14] sm:$0xf] %v226
    %243 = vst [vmem:[#allocation7 + $0x18] sm:$0xf] %v227
    %244 = vst [vmem:[#allocation7 + $0x1c] sm:$0xf] %v228
    %245 = vst [vmem:[#allocation7 + $0x20] sm:$0xf] %v229
    %246 = vst [vmem:[#allocation7 + $0x24] sm:$0xf] %v230
    %247 = vst [vmem:[#allocation7 + $0x28] sm:$0xf] %v231
    %248 = vst [vmem:[#allocation7 + $0x2c] sm:$0xf] %v232
    %249 = vst [vmem:[#allocation7 + $0x30] sm:$0xf] %v233
    %250 = vst [vmem:[#allocation7 + $0x34] sm:$0xf] %v234
    %251 = vst [vmem:[#allocation7 + $0x38] sm:$0xf] %v235
    %252 = vst [vmem:[#allocation7 + $0x3c] sm:$0xf] %v236
    // Predicated region
    $region18: #{tpu_custom_call.1} parent=1 // pred_check
      _
    $region19: #{tpu_custom_call.1} parent=1 // pred_check_branch
      %254 = sbr.rel (0) target = $region21
    $region20: #{tpu_custom_call.1} parent=1 // pred_region
      %256 = vsyncadd [#allocation4], 0
      %s257 = sshll.u32 [#allocation7], 4
      %s258 = int_to_ptr.vmem [resolvable:$true] %s257
      %s259 = sshll.u32 %s2, 4
      %s260 = int_to_ptr.hbm [resolvable:$true] %s259
      %265 = dma.vmem_to_hbm [thread:$0]  %s258, 1024, %s260, [#allocation4], 64, 64, 4
    $region21: #{tpu_custom_call.1} parent=1 // pred_fallthru
      _
    // Predicated region
    $region22: #{tpu_custom_call.1} parent=1 // pred_check
      _
    $region23: #{tpu_custom_call.1} parent=1 // pred_check_branch
      %267 = sbr.rel (0) target = $region25
    $region24: #{tpu_custom_call.1} parent=1 // pred_region
      %269 = dma.done [#allocation4], 1024
    $region25: #{tpu_custom_call.1} parent=1 // pred_fallthru
      _
    %270 = vsyncpa [#allocation3], 1
    %271 = vsyncpa [#allocation6], 1
    %272 = vsyncpa [#allocation4], 1

</llo_original>
